<compile_context>
chip_gen: v5e
topology: v5e:2x2
jax: 0.10.0
libtpu: 0.0.40
codegen_flags: <defaults>
</compile_context>

<pallas_src>
import jax
import jax.numpy as jnp
import numpy as np
from jax.experimental import pallas as pl
from jax.experimental.pallas import tpu as pltpu

_VMEM_LIMIT = 32 * 1024 * 1024  # explicit scoped-VMEM budget; ample headroom on v5e/v6e/v7x


# -----------------------------------------------------------------------------
# Kernel 1: parameter_model (latent decoder) -> per-batch hidden contribution
#   hss[b] = W1_ss^T tanh(latent[b] @ W_dec + b_dec)          shape (Hid, H*W)
# Grid (B, C_s): one (L, HW) decoder-weight slab per step (keeps VMEM bounded even
# for production C_s*H*W; v7x has only 64 MiB), accumulating into the VMEM-resident
# output block across the C_s axis.
# -----------------------------------------------------------------------------
def _decode_kernel(latent_ref, wdec_ref, bdec_ref, w1ss_ref, hss_ref):
    @pl.when(pl.program_id(1) == 0)
    def _init():
        hss_ref[...] = jnp.zeros_like(hss_ref)

    z = latent_ref[0].astype(jnp.bfloat16)                         # (1, L)
    dec = jnp.dot(z, wdec_ref[0],
                  preferred_element_type=jnp.float32)              # (1, HW)  MXU
    ss = jnp.tanh(dec + bdec_ref[0])                               # (1, HW)  f32
    # C_s contraction is tiny -> outer-product accumulate on the VPU; no padded MXU
    # tile, no sublane-row scatter of the decoded field.
    hss_ref[0] = hss_ref[0] + w1ss_ref[0] * ss                     # (Hid,1)*(1,HW)
    # TODO(synk): for very large H*W also tile the HW axis of the decoder output.


# -----------------------------------------------------------------------------
# Kernel 2: forward_model (pointwise MLP) over one (batch, T-tile) grid step.
# Pixels stay on the lane axis throughout; the whole T-tile (t_tile*HW lanes) is
# accumulated into one bf16 VMEM slab so the output projection is a single wide
# MXU matmul and a single dense store per grid step.
# -----------------------------------------------------------------------------
def _mlp_kernel(hss_ref, w1ds_ref, w2t_ref, b2_ref, hbias_ref, ds_ref,
                out_ref, h_ref):
    """Block shapes:
      hss_ref  : (1, Hid, HW)  f32      w1ds_ref : (Hid, C_d)   f32
      w2t_ref  : (C_out, Hid)  bf16     b2_ref   : (C_out, 1)   f32
      hbias_ref: (1, 1, Hid, t_tile) f32
      ds_ref   : (1, t_tile, C_d*HW) f32
      out_ref  : (1, C_out, t_tile*HW) f32
      h_ref    : (Hid, t_tile*HW) bf16 scratch
    """
    Hid, HW = hss_ref.shape[1], hss_ref.shape[2]
    t_tile = ds_ref.shape[1]
    C_d = ds_ref.shape[2] // HW

    hss = hss_ref[0]                      # (Hid, HW) f32, reused for every timestep
    hb = hbias_ref[0, 0]                  # (Hid, t_tile) f32
    # Hoisted lane-broadcasts of the tiny dynamic-spatial W1 columns (JAX does not
    # CSE broadcast_in_dim; broadcast once, not per timestep).
    w1b = [jnp.broadcast_to(w1ds_ref[:, c:c + 1], (Hid, HW)) for c in range(C_d)]

    # Per-timestep hidden pre-activation; C_d is tiny so the contraction runs as VPU
    # broadcast-FMA instead of an (almost all padding) MXU tile.  Each ReLU'd slab is
    # stored straight to the bf16 scratch at a vreg-aligned lane offset (HW % 128 == 0),
    # which bounds vreg live ranges across the unrolled loop.
    # TODO(synk): switch to lax.fori_loop (+ dynamic lane offsets) and an MXU dot once
    # t_tile / C_d grow beyond toy sizes.
    for j in range(t_tile):
        row = ds_ref[0, j:j + 1, :]                            # (1, C_d*HW) f32
        h_j = hss + hb[:, j:j + 1]                             # (Hid, HW) f32
        for c in range(C_d):
            h_j = h_j + w1b[c] * row[:, c * HW:(c + 1) * HW]   # VPU broadcast-FMA
        h_ref[:, j * HW:(j + 1) * HW] = jnp.maximum(h_j, 0.0).astype(h_ref.dtype)

    # One wide output projection over all t_tile*HW pixels + one dense store.
    o = jnp.dot(w2t_ref[...], h_ref[...],
                preferred_element_type=jnp.float32)            # (C_out, t_tile*HW)
    out_ref[0] = (o + b2_ref[...]).astype(out_ref.dtype)


# -----------------------------------------------------------------------------
# LatentToOutputModel.forward equivalent
# -----------------------------------------------------------------------------
def latent_to_output_forward(params,
                             static_spatial_parameters=None,   # latent (B, L)
                             static_point_parameters=None,     # (B, P_s)
                             dynamic_point_parameters=None,    # (B, T, P_d)
                             dynamic_spatial_parameters=None,  # (B, T, C_d, H, W)
                             *, t_tile=None):
    latent = static_spatial_parameters
    sp = static_point_parameters
    dp = dynamic_point_parameters
    ds = dynamic_spatial_parameters

    B, L = latent.shape
    _, T, C_d, H, W = ds.shape
    HW = H * W
    C_s = params["C_s"]
    Hid = params["w1"].shape[1]
    C_out = params["w2"].shape[1]
    P_s = sp.shape[1]

    # Split W1 by feature stream; order matches the reference concatenation
    # [static_spatial, dynamic_spatial, static_point, dynamic_point].
    w1 = params["w1"]
    w1_ss = w1[:C_s]
    w1_ds = w1[C_s:C_s + C_d]
    w1_sp = w1[C_s + C_d:C_s + C_d + P_s]
    w1_dp = w1[C_s + C_d + P_s:]

    if t_tile is None or t_tile >= T:
        t_tile = T
    assert T % t_tile == 0 and (t_tile == T or t_tile % 8 == 0), \
        "t_tile must divide T and be a multiple of 8 (or equal T)"
    num_tt = T // t_tile

    # ---- Kernel 1: latent -> hss (B, Hid, HW).  Decoder weights pre-arranged per
    # channel so each grid step streams one (L, HW) slab; bf16 at rest, f32 accumulate.
    wdec_c = params["w_dec"].reshape(L, C_s, HW).transpose(1, 0, 2).astype(jnp.bfloat16)
    bdec_c = params["b_dec"].reshape(1, C_s, HW).transpose(1, 0, 2).astype(jnp.float32)
    w1ss_c = w1_ss[:, :, None].astype(jnp.float32)                 # (C_s, Hid, 1)
    latent3 = latent.reshape(B, 1, L)

    hss = pl.pallas_call(
        _decode_kernel,
        out_shape=jax.ShapeDtypeStruct((B, Hid, HW), jnp.float32),
        grid=(B, C_s),
        in_specs=[
            pl.BlockSpec((1, 1, L), lambda b, c: (b, 0, 0)),        # latent
            pl.BlockSpec((1, L, HW), lambda b, c: (c, 0, 0)),       # W_dec channel slab
            pl.BlockSpec((1, 1, HW), lambda b, c: (c, 0, 0)),       # b_dec channel slab
            pl.BlockSpec((1, Hid, 1), lambda b, c: (c, 0, 0)),      # W1_ss column
        ],
        out_specs=pl.BlockSpec((1, Hid, HW), lambda b, c: (b, 0, 0)),
        compiler_params=pltpu.CompilerParams(
            dimension_semantics=("parallel", "arbitrary"),
            vmem_limit_bytes=_VMEM_LIMIT),
    )(latent3, wdec_c, bdec_c, w1ss_c)

    # ---- Spatially-constant point parameters -> per-(b, t) hidden bias (tiny; XLA),
    # pre-tiled to (B, num_tt, Hid, t_tile) so the kernel block is layout-legal for any
    # t_tile and each per-timestep slice is already the (Hid, 1) sublane layout needed.
    hbias = (params["b1"][None]                                # (1, 1, Hid)
             + (sp @ w1_sp)[:, None, :]                        # (B, 1, Hid)
             + jnp.einsum("btp,ph->bth", dp, w1_dp))           # (B, T, Hid)
    hbias = hbias.reshape(B, num_tt, t_tile, Hid).transpose(0, 1, 3, 2)
    hbias = hbias.astype(jnp.float32)

    # ---- Kernel 2 operands (pixel axis last, dense (8,128) blocks throughout) ----
    w1ds = w1_ds.T.astype(jnp.float32)                         # (Hid, C_d)  VPU operand
    w2t = params["w2"].T.astype(jnp.bfloat16)                  # (C_out, Hid) MXU operand
    b2 = params["b2"].reshape(C_out, 1).astype(jnp.float32)    # (C_out, 1)
    ds_flat = ds.reshape(B, T, C_d * HW)                       # free reshape, dense blocks
    # NOTE: ds / out stay f32; stream them bf16 only if producer/consumer natively use
    # bf16 (a standalone wrapper-side cast would add a full extra HBM pass).

    out = pl.pallas_call(
        _mlp_kernel,
        out_shape=jax.ShapeDtypeStruct((B, C_out, T * HW), jnp.float32),
        grid=(B, num_tt),
        in_specs=[
            pl.BlockSpec((1, Hid, HW), lambda b, tt: (b, 0, 0)),             # hss
            pl.BlockSpec((Hid, C_d), lambda b, tt: (0, 0)),                  # W1_ds^T
            pl.BlockSpec((C_out, Hid), lambda b, tt: (0, 0)),                # W2^T
            pl.BlockSpec((C_out, 1), lambda b, tt: (0, 0)),                  # b2
            pl.BlockSpec((1, 1, Hid, t_tile), lambda b, tt: (b, tt, 0, 0)),  # hidden bias
            pl.BlockSpec((1, t_tile, C_d * HW), lambda b, tt: (b, tt, 0)),   # dyn. spatial
        ],
        out_specs=pl.BlockSpec((1, C_out, t_tile * HW), lambda b, tt: (b, 0, tt)),
        scratch_shapes=[pltpu.VMEM((Hid, t_tile * HW), jnp.bfloat16)],
        compiler_params=pltpu.CompilerParams(
            # No cross-grid-step state anymore -> both axes shard across v7x's 2 cores.
            dimension_semantics=("parallel", "parallel"),
            vmem_limit_bytes=_VMEM_LIMIT),
    )(hss, w1ds, w2t, b2, hbias, ds_flat)

    # (B, C_out, T*HW) -> (B, T, C_out, H, W); the axis move is free for C_out == 1.
    out = jnp.moveaxis(out.reshape(B, C_out, T, H, W), 1, 2)
    return out


# -----------------------------------------------------------------------------
# Pure-JAX f32 reference (original broadcast + concat formulation) for validation
# -----------------------------------------------------------------------------
def reference_forward(params, latent, sp, dp, ds):
    B, L = latent.shape
    _, T, C_d, H, W = ds.shape
    C_s = params["C_s"]
    P_s = sp.shape[1]
    P_d = dp.shape[2]
    C_out = params["w2"].shape[1]

    ss = jnp.tanh(latent @ params["w_dec"] + params["b_dec"]).reshape(B, C_s, H, W)
    ss_b = jnp.broadcast_to(ss[:, None], (B, T, C_s, H, W))
    sp_b = jnp.broadcast_to(sp[:, None, :, None, None], (B, T, P_s, H, W))
    dp_b = jnp.broadcast_to(dp[:, :, :, None, None], (B, T, P_d, H, W))
    feats = jnp.concatenate([ss_b, ds, sp_b, dp_b], axis=2)
    x = jnp.transpose(feats, (0, 1, 3, 4, 2)).reshape(-1, feats.shape[2])
    h = jnp.maximum(x @ params["w1"] + params["b1"], 0.0)
    y = h @ params["w2"] + params["b2"]
    y = y.reshape(B, T, H, W, C_out)
    return jnp.transpose(y, (0, 1, 4, 2, 3))


def init_params(key, L, C_s, H, W, C_d, P_s, P_d, hidden, C_out):
    ks = jax.random.split(key, 6)
    D = C_s * H * W
    C_in = C_s + C_d + P_s + P_d
    return {
        "C_s": C_s,
        "w_dec": jax.random.normal(ks[0], (L, D), jnp.float32) * 0.05,
        "b_dec": jax.random.normal(ks[1], (1, D), jnp.float32) * 0.02,
        "w1": jax.random.normal(ks[2], (C_in, hidden), jnp.float32) * 0.1,
        "b1": jax.random.normal(ks[3], (1, hidden), jnp.float32) * 0.02,
        "w2": jax.random.normal(ks[4], (hidden, C_out), jnp.float32) * 0.1,
        "b2": jax.random.normal(ks[5], (1, C_out), jnp.float32) * 0.02,
    }


if __name__ == "__main__":
    B, L = 2, 32
    C_s, H, W = 4, 16, 16
    T, C_d = 8, 2
    P_s, P_d = 3, 2
    hidden, C_out = 32, 1

    key = jax.random.PRNGKey(0)
    k_param, k_lat, k_sp, k_dp, k_ds = jax.random.split(key, 5)

    params = init_params(k_param, L, C_s, H, W, C_d, P_s, P_d, hidden, C_out)

    latent = jax.random.normal(k_lat, (B, L), jnp.float32)
    static_point = jax.random.normal(k_sp, (B, P_s), jnp.float32)
    dynamic_point = jax.random.normal(k_dp, (B, T, P_d), jnp.float32)
    dynamic_spatial = jax.random.normal(k_ds, (B, T, C_d, H, W), jnp.float32)

    out = latent_to_output_forward(
        params,
        static_spatial_parameters=latent,
        static_point_parameters=static_point,
        dynamic_point_parameters=dynamic_point,
        dynamic_spatial_parameters=dynamic_spatial,
    )
    out = jax.block_until_ready(out)
    assert out.shape == (B, T, C_out, H, W), out.shape

    ref = jax.block_until_ready(
        reference_forward(params, latent, static_point, dynamic_point, dynamic_spatial))
    np.testing.assert_allclose(np.asarray(out), np.asarray(ref), rtol=5e-2, atol=5e-2)

    print("KERNEL_OK")
</pallas_src>

<mosaic_0001>
module attributes {stable_mosaic.version = 11 : i64} {
  func.func @_decode_kernel(%arg0: i32, %arg1: i32, %arg2: memref<1x1x32xf32, #tpu.memory_space<vmem>>, %arg3: memref<1x32x256xbf16, #tpu.memory_space<vmem>>, %arg4: memref<1x1x256xf32, #tpu.memory_space<vmem>>, %arg5: memref<1x32x1xf32, #tpu.memory_space<vmem>>, %arg6: memref<1x32x256xf32, #tpu.memory_space<vmem>>) attributes {dimension_semantics = [#tpu.dimension_semantics<parallel>, #tpu.dimension_semantics<arbitrary>], iteration_bounds = array<i64: 2, 4>, scalar_prefetch = 0 : i64, scratch_operands = 0 : i64, tpu.core_type = #tpu.core_type<tc>, window_params = [{transform_indices = @transform_0, window_bounds = array<i64: 1, 1, 32>}, {transform_indices = @transform_1, window_bounds = array<i64: 1, 32, 256>}, {transform_indices = @transform_2, window_bounds = array<i64: 1, 1, 256>}, {transform_indices = @transform_3, window_bounds = array<i64: 1, 32, 1>}, {transform_indices = @transform_4, window_bounds = array<i64: 1, 32, 256>}]} {
    %c0_i32 = arith.constant 0 : i32
    %0 = arith.cmpi eq, %arg1, %c0_i32 : i32
    %1 = arith.extui %0 : i1 to i32
    %c0_i32_0 = arith.constant 0 : i32
    %2 = arith.cmpi ne, %1, %c0_i32_0 : i32
    scf.if %2 {
      %cst_18 = arith.constant 0.000000e+00 : f32
      %24 = vector.broadcast %cst_18 : f32 to vector<1x32x256xf32>
      %c0_19 = arith.constant 0 : index
      %c0_20 = arith.constant 0 : index
      %c0_21 = arith.constant 0 : index
      %25 = vector.load %arg6[%c0_19, %c0_20, %c0_21] : memref<1x32x256xf32, #tpu.memory_space<vmem>>, vector<1x32x256xf32>
      tpu.vector_store %arg6[%c0_19, %c0_20, %c0_21], %24 {strides = array<i32>} : memref<1x32x256xf32, #tpu.memory_space<vmem>>, vector<1x32x256xf32>,
    } else {
    }
    %c0 = arith.constant 0 : index
    %c0_1 = arith.constant 0 : index
    %c0_2 = arith.constant 0 : index
    %3 = vector.load %arg2[%c0, %c0_1, %c0_2] : memref<1x1x32xf32, #tpu.memory_space<vmem>>, vector<1x1x32xf32>
    %4 = vector.shape_cast %3 : vector<1x1x32xf32> to vector<1x32xf32>
    %5 = arith.truncf %4 : vector<1x32xf32> to vector<1x32xbf16>
    %c0_3 = arith.constant 0 : index
    %c0_4 = arith.constant 0 : index
    %c0_5 = arith.constant 0 : index
    %6 = vector.load %arg3[%c0_3, %c0_4, %c0_5] : memref<1x32x256xbf16, #tpu.memory_space<vmem>>, vector<1x32x256xbf16>
    %7 = vector.shape_cast %6 : vector<1x32x256xbf16> to vector<32x256xbf16>
    %cst = arith.constant dense<0.000000e+00> : vector<1x256xf32>
    %8 = tpu.matmul %5, %7, %cst {dimension_numbers = #tpu.dot_dimension_numbers<[1], [0], [0], [1], [0, 0, 1, 1], [], []>} : vector<1x32xbf16>, vector<32x256xbf16>, vector<1x256xf32> -> vector<1x256xf32>
    %c0_6 = arith.constant 0 : index
    %c0_7 = arith.constant 0 : index
    %c0_8 = arith.constant 0 : index
    %9 = vector.load %arg4[%c0_6, %c0_7, %c0_8] : memref<1x1x256xf32, #tpu.memory_space<vmem>>, vector<1x1x256xf32>
    %10 = vector.shape_cast %9 : vector<1x1x256xf32> to vector<1x256xf32>
    %11 = arith.addf %8, %10 : vector<1x256xf32>
    %12 = math.tanh %11 : vector<1x256xf32>
    %c0_9 = arith.constant 0 : index
    %c0_10 = arith.constant 0 : index
    %c0_11 = arith.constant 0 : index
    %13 = vector.load %arg6[%c0_9, %c0_10, %c0_11] : memref<1x32x256xf32, #tpu.memory_space<vmem>>, vector<1x32x256xf32>
    %14 = vector.shape_cast %13 : vector<1x32x256xf32> to vector<32x256xf32>
    %c0_12 = arith.constant 0 : index
    %c0_13 = arith.constant 0 : index
    %c0_14 = arith.constant 0 : index
    %15 = vector.load %arg5[%c0_12, %c0_13, %c0_14] : memref<1x32x1xf32, #tpu.memory_space<vmem>>, vector<1x32x1xf32>
    %16 = vector.shape_cast %15 : vector<1x32x1xf32> to vector<32x1xf32>
    %17 = vector.broadcast %16 : vector<32x1xf32> to vector<32x256xf32>
    %18 = vector.broadcast %12 : vector<1x256xf32> to vector<32x256xf32>
    %19 = arith.mulf %17, %18 : vector<32x256xf32>
    %20 = arith.addf %14, %19 : vector<32x256xf32>
    %c0_15 = arith.constant 0 : index
    %c0_16 = arith.constant 0 : index
    %c0_17 = arith.constant 0 : index
    %21 = vector.load %arg6[%c0_15, %c0_16, %c0_17] : memref<1x32x256xf32, #tpu.memory_space<vmem>>, vector<1x32x256xf32>
    %22 = vector.shape_cast %21 : vector<1x32x256xf32> to vector<32x256xf32>
    %23 = vector.shape_cast %20 : vector<32x256xf32> to vector<1x32x256xf32>
    tpu.vector_store %arg6[%c0_15, %c0_16, %c0_17], %23 {strides = array<i32>} : memref<1x32x256xf32, #tpu.memory_space<vmem>>, vector<1x32x256xf32>,
    return
  }
  func.func @transform_0(%arg0: i32, %arg1: i32) -> (i32, i32, i32) {
    %c0_i32 = arith.constant 0 : i32
    %c0_i32_0 = arith.constant 0 : i32
    %c0_i32_1 = arith.constant 0 : i32
    return %arg0, %c0_i32, %c0_i32_0 : i32, i32, i32
  }
  func.func @transform_1(%arg0: i32, %arg1: i32) -> (i32, i32, i32) {
    %c0_i32 = arith.constant 0 : i32
    %c0_i32_0 = arith.constant 0 : i32
    %c0_i32_1 = arith.constant 0 : i32
    return %arg1, %c0_i32, %c0_i32_0 : i32, i32, i32
  }
  func.func @transform_2(%arg0: i32, %arg1: i32) -> (i32, i32, i32) {
    %c0_i32 = arith.constant 0 : i32
    %c0_i32_0 = arith.constant 0 : i32
    %c0_i32_1 = arith.constant 0 : i32
    return %arg1, %c0_i32, %c0_i32_0 : i32, i32, i32
  }
  func.func @transform_3(%arg0: i32, %arg1: i32) -> (i32, i32, i32) {
    %c0_i32 = arith.constant 0 : i32
    %c0_i32_0 = arith.constant 0 : i32
    %c0_i32_1 = arith.constant 0 : i32
    return %arg1, %c0_i32, %c0_i32_0 : i32, i32, i32
  }
  func.func @transform_4(%arg0: i32, %arg1: i32) -> (i32, i32, i32) {
    %c0_i32 = arith.constant 0 : i32
    %c0_i32_0 = arith.constant 0 : i32
    %c0_i32_1 = arith.constant 0 : i32
    return %arg0, %c0_i32, %c0_i32_0 : i32, i32, i32
  }
}

</mosaic_0001>

<llo_original>
// kernel: tpu_custom_call.1
$region0: #{tpu_custom_call.1}
  #allocation0 [shape = 'u32[]', space=smem, size = 0x4, offset = 0x4, fixed_abs, tag = 'smem constant byte address 0x4 - core index']
  #allocation1 [shape = 'u32[72,128]{1,0:T(1,128)}', space=vmem, size = 0x9000, scoped, tag = 'internal scratch']
  %s0 = inlined_call_operand.vmem [shape: f32[2,1,32], index: 0, kind: input, shape index: {}]
  %s1 = inlined_call_operand.vmem [shape: bf16[4,32,256], index: 1, kind: input, shape index: {}]
  %s2 = inlined_call_operand.hbm [shape: f32[4,1,256], index: 2, kind: input, shape index: {}]
  %s3 = inlined_call_operand.vmem [shape: f32[4,32,1], index: 3, kind: input, shape index: {}]
  %s4 = inlined_call_operand.hbm [shape: f32[2,32,256], index: 4, kind: output, shape index: {}]
  %s5 = sld [smem:[#allocation0]]
  $region57: #{tpu_custom_call.1} parent=0
    _
  %s7 = ssub.s32 1, %s5
  %s8 = scalar_select 0, %s7, %s5
  $region1: #{tpu_custom_call.1} parent=0
    #allocation2 [shape = 'u8[2048]{0}', space=vmem, size = 0x800, scoped, tag = 'input window, operand 2']
    #allocation3 [shape = 's32[2]{0}', space=sflag, size = 0x8, scoped, tag = 'scoped memory for tpu_custom_call.1']
    #allocation4 [shape = 's32[2]{0}', space=sflag, size = 0x8, scoped, tag = 'scoped memory for tpu_custom_call.1']
    #allocation5 [shape = 'u8[65536]{0}', space=vmem, size = 0x10000, scoped, tag = 'output window, operand 0']
    %9 = vsyncpa [#allocation3], 0
    %s10 = scalar_lea.sflag [#allocation3], 1
    %11 = vsyncpa %s10, 0
    %12 = vsyncpa [#allocation4], 0
    %s13 = scalar_lea.sflag [#allocation4], 1
    %14 = vsyncpa %s13, 0
    loop: start=0, step=1, limit=10
    $region2: #{tpu_custom_call.1} parent=1 // loop_pre_header
      _
    $region3: #{tpu_custom_call.1} parent=1 // loop_header
      %s16 = sphi 0, %s20
      %p17 = scmp.ge.s32.totalorder %s16, 10
      %s23 = sphi 0, %s35
      %s24 = sphi 0, %s31
      %s25 = sphi 0, %s23
      %s26 = sphi 0, %s24
      %s27 = sphi 0, %s25
      %s28 = sphi 0, %s26
      %s38 = sphi 0, %s40
      %s41 = sphi 0, %s38
      %s42 = sphi 0, %s41
      %s58 = sphi 0, %s42
      %s64 = sphi 0, %s66
      %s67 = sphi 0, %s64
      %s68 = sphi 0, %s67
      %s84 = sphi 0, %s68
      %s90 = sphi 0, %s92
      %s93 = sphi 0, %s90
      %s94 = sphi 0, %s93
      %s110 = sphi 0, %s94
      %s116 = sphi 0, %s118
      %s119 = sphi 0, %s116
      %s120 = sphi 0, %s119
      %s136 = sphi 0, %s120
      %s142 = sphi 0, %s144
      %s145 = sphi 0, %s142
      %s146 = sphi 0, %s145
      %s162 = sphi 0, %s146
    $region4: #{tpu_custom_call.1} parent=1 // loop_header_branch
      %19 = sbr.rel (%p17) target = $region8
    $region5: #{tpu_custom_call.1} parent=1 // loop_body
      %s21 = ssub.s32 %s16, 1
      %s22 = ssub.s32 %s16, 2
      %s29 = sadd.s32 1, %s24
      %p30 = scmp.ge.s32.totalorder %s29, 4
      %s31 = scalar_select %p30, 0, %s29
      %s32 = sadd.s32 1, %s23
      %s33 = scalar_select %p30, %s32, %s23
      %p34 = scmp.ge.s32.totalorder %s33, 2
      %s35 = scalar_select %p34, 0, %s33
      %s36 = ssub.s32 %s23, %s35
      %p37 = scmp.eq.s32.totalorder %s36, 0
      %s39 = sadd.s32 %s38, 1
      %s40 = scalar_select %p37, %s38, %s39
      %p43 = pneg %p37
      %p44 = scmp.eq.s32.totalorder %s16, 7
      %p45 = por %p43, %p44
      %p46 = scmp.ne.s32.totalorder %s38, %s41
      %p47 = scmp.eq.s32.totalorder %s16, 0
      %p48 = por %p46, %p47
      %p49 = scmp.ne.s32.totalorder %s38, %s41
      %p50 = scmp.eq.s32.totalorder %s21, 7
      %p51 = por %p49, %p50
      %p52 = scmp.ne.s32.totalorder %s41, %s42
      %p53 = scmp.eq.s32.totalorder %s21, 0
      %p54 = por %p52, %p53
      %p55 = scmp.ne.s32.totalorder %s41, %s42
      %p56 = scmp.eq.s32.totalorder %s22, 7
      %p57 = por %p55, %p56
      %p59 = scmp.ne.s32.totalorder %s42, %s58
      %p60 = scmp.eq.s32.totalorder %s22, 0
      %p61 = por %p59, %p60
      %s62 = ssub.s32 %s24, %s31
      %p63 = scmp.eq.s32.totalorder %s62, 0
      %s65 = sadd.s32 %s64, 1
      %s66 = scalar_select %p63, %s64, %s65
      %p69 = pneg %p63
      %p70 = scmp.eq.s32.totalorder %s16, 7
      %p71 = por %p69, %p70
      %p72 = scmp.ne.s32.totalorder %s64, %s67
      %p73 = scmp.eq.s32.totalorder %s16, 0
      %p74 = por %p72, %p73
      %p75 = scmp.ne.s32.totalorder %s64, %s67
      %p76 = scmp.eq.s32.totalorder %s21, 7
      %p77 = por %p75, %p76
      %p78 = scmp.ne.s32.totalorder %s67, %s68
      %p79 = scmp.eq.s32.totalorder %s21, 0
      %p80 = por %p78, %p79
      %p81 = scmp.ne.s32.totalorder %s67, %s68
      %p82 = scmp.eq.s32.totalorder %s22, 7
      %p83 = por %p81, %p82
      %p85 = scmp.ne.s32.totalorder %s68, %s84
      %p86 = scmp.eq.s32.totalorder %s22, 0
      %p87 = por %p85, %p86
      %s88 = ssub.s32 %s24, %s31
      %p89 = scmp.eq.s32.totalorder %s88, 0
      %s91 = sadd.s32 %s90, 1
      %s92 = scalar_select %p89, %s90, %s91
      %p95 = pneg %p89
      %p96 = scmp.eq.s32.totalorder %s16, 7
      %p97 = por %p95, %p96
      %p98 = scmp.ne.s32.totalorder %s90, %s93
      %p99 = scmp.eq.s32.totalorder %s16, 0
      %p100 = por %p98, %p99
      %p101 = scmp.ne.s32.totalorder %s90, %s93
      %p102 = scmp.eq.s32.totalorder %s21, 7
      %p103 = por %p101, %p102
      %p104 = scmp.ne.s32.totalorder %s93, %s94
      %p105 = scmp.eq.s32.totalorder %s21, 0
      %p106 = por %p104, %p105
      %p107 = scmp.ne.s32.totalorder %s93, %s94
      %p108 = scmp.eq.s32.totalorder %s22, 7
      %p109 = por %p107, %p108
      %p111 = scmp.ne.s32.totalorder %s94, %s110
      %p112 = scmp.eq.s32.totalorder %s22, 0
      %p113 = por %p111, %p112
      %s114 = ssub.s32 %s24, %s31
      %p115 = scmp.eq.s32.totalorder %s114, 0
      %s117 = sadd.s32 %s116, 1
      %s118 = scalar_select %p115, %s116, %s117
      %p121 = pneg %p115
      %p122 = scmp.eq.s32.totalorder %s16, 7
      %p123 = por %p121, %p122
      %p124 = scmp.ne.s32.totalorder %s116, %s119
      %p125 = scmp.eq.s32.totalorder %s16, 0
      %p126 = por %p124, %p125
      %p127 = scmp.ne.s32.totalorder %s116, %s119
      %p128 = scmp.eq.s32.totalorder %s21, 7
      %p129 = por %p127, %p128
      %p130 = scmp.ne.s32.totalorder %s119, %s120
      %p131 = scmp.eq.s32.totalorder %s21, 0
      %p132 = por %p130, %p131
      %p133 = scmp.ne.s32.totalorder %s119, %s120
      %p134 = scmp.eq.s32.totalorder %s22, 7
      %p135 = por %p133, %p134
      %p137 = scmp.ne.s32.totalorder %s120, %s136
      %p138 = scmp.eq.s32.totalorder %s22, 0
      %p139 = por %p137, %p138
      %s140 = ssub.s32 %s23, %s35
      %p141 = scmp.eq.s32.totalorder %s140, 0
      %s143 = sadd.s32 %s142, 1
      %s144 = scalar_select %p141, %s142, %s143
      %p147 = pneg %p141
      %p148 = scmp.eq.s32.totalorder %s16, 7
      %p149 = por %p147, %p148
      %p150 = scmp.ne.s32.totalorder %s142, %s145
      %p151 = scmp.eq.s32.totalorder %s16, 0
      %p152 = por %p150, %p151
      %p153 = scmp.ne.s32.totalorder %s142, %s145
      %p154 = scmp.eq.s32.totalorder %s21, 7
      %p155 = por %p153, %p154
      %p156 = scmp.ne.s32.totalorder %s145, %s146
      %p157 = scmp.eq.s32.totalorder %s21, 0
      %p158 = por %p156, %p157
      %p159 = scmp.ne.s32.totalorder %s145, %s146
      %p160 = scmp.eq.s32.totalorder %s22, 7
      %p161 = por %p159, %p160
      %p163 = scmp.ne.s32.totalorder %s146, %s162
      %p164 = scmp.eq.s32.totalorder %s22, 0
      %p165 = por %p163, %p164
      %p166 = scmp.le.s32.totalorder 1, %s16
      %p167 = scmp.lt.s32.totalorder %s16, 9
      %p168 = pnand %p166, %p167
      %p169 = pneg %p168
      // Predicated region
      $region9: #{tpu_custom_call.1} parent=5 // pred_check
        _
      $region10: #{tpu_custom_call.1} parent=5 // pred_check_branch
        %171 = sbr.rel (%p168) target = $region12
      $region11: #{tpu_custom_call.1} parent=5 // pred_region
        %s172 = ssub.s32 %s16, 1
      $region12: #{tpu_custom_call.1} parent=5 // pred_fallthru
        _
      %p173 = scmp.lt.s32.totalorder %s16, 8
      // Predicated region
      $region13: #{tpu_custom_call.1} parent=5 // pred_check
        %p174 = pneg %p173
      $region14: #{tpu_custom_call.1} parent=5 // pred_check_branch
        %176 = sbr.rel (%p174) target = $region16
      $region15: #{tpu_custom_call.1} parent=5 // pred_region
        // Predicated region
        $region17: #{tpu_custom_call.1} parent=15 // pred_check
          %p177 = pneg %p48
        $region18: #{tpu_custom_call.1} parent=15 // pred_check_branch
          %179 = sbr.rel (%p177) target = $region20
        $region19: #{tpu_custom_call.1} parent=15 // pred_region
          %p180 = scmp.lt.s32.totalorder %s23, 1
          %s181 = scalar_select %p180, %s23, 1
          %s182 = scalar_lea.vmem %s0, %s181
        $region20: #{tpu_custom_call.1} parent=15 // pred_fallthru
          _
        // Predicated region
        $region21: #{tpu_custom_call.1} parent=15 // pred_check
          %p183 = pneg %p74
        $region22: #{tpu_custom_call.1} parent=15 // pred_check_branch
          %185 = sbr.rel (%p183) target = $region24
        $region23: #{tpu_custom_call.1} parent=15 // pred_region
          %p186 = scmp.lt.s32.totalorder %s24, 3
          %s187 = scalar_select %p186, %s24, 3
          %s188 = smul.addr %s187, 8
          %s189 = smul.addr %s188, 4
          %s190 = scalar_lea.vmem %s1, %s189
        $region24: #{tpu_custom_call.1} parent=15 // pred_fallthru
          _
        // Predicated region
        $region25: #{tpu_custom_call.1} parent=15 // pred_check
          %p191 = pneg %p100
        $region26: #{tpu_custom_call.1} parent=15 // pred_check_branch
          %193 = sbr.rel (%p191) target = $region28
        $region27: #{tpu_custom_call.1} parent=15 // pred_region
          %s194 = sand.u32 %s90, 1
          %s195 = scalar_lea.sflag [#allocation3], %s194
          %s196 = sand.u32 %s90, 1
          %s197 = smul.addr %s196, 2
          %s198 = scalar_lea.vmem [#allocation2], %s197
          %200 = vsyncadd %s195, 0
          %s201 = smul.addr %s24, 2
          %s202 = scalar_lea.hbm %s2, %s201
          %s204 = sshll.u32 %s202, 4
          %s205 = int_to_ptr.hbm [resolvable:$true] %s204
          %s206 = sshll.u32 %s198, 4
          %s207 = int_to_ptr.vmem [resolvable:$true] %s206
          %209 = dma.hbm_to_vmem [thread:$0]  %s205, 32, %s207, %s195
        $region28: #{tpu_custom_call.1} parent=15 // pred_fallthru
          _
        // Predicated region
        $region29: #{tpu_custom_call.1} parent=15 // pred_check
          %p210 = pneg %p126
        $region30: #{tpu_custom_call.1} parent=15 // pred_check_branch
          %212 = sbr.rel (%p210) target = $region32
        $region31: #{tpu_custom_call.1} parent=15 // pred_region
          %p213 = scmp.lt.s32.totalorder %s24, 3
          %s214 = scalar_select %p213, %s24, 3
          %s215 = smul.addr %s214, 4
          %s216 = smul.addr %s215, 8
          %s217 = scalar_lea.vmem %s3, %s216
        $region32: #{tpu_custom_call.1} parent=15 // pred_fallthru
          _
      $region16: #{tpu_custom_call.1} parent=5 // pred_fallthru
        _
      %p218 = scmp.le.s32.totalorder 1, %s16
      %p219 = scmp.lt.s32.totalorder %s16, 9
      %p220 = pnand %p218, %p219
      %p221 = pneg %p220
      // Predicated region
      $region33: #{tpu_custom_call.1} parent=5 // pred_check
        _
      $region34: #{tpu_custom_call.1} parent=5 // pred_check_branch
        %223 = sbr.rel (%p220) target = $region36
      $region35: #{tpu_custom_call.1} parent=5 // pred_region
        %s224 = ssub.s32 %s16, 1
        %s225 = sand.u32 %s93, 1
        %s226 = scalar_lea.sflag [#allocation3], %s225
        %s227 = sand.u32 %s93, 1
        %s228 = smul.addr %s227, 2
        %s229 = scalar_lea.vmem [#allocation2], %s228
        // Predicated region
        $region37: #{tpu_custom_call.1} parent=35 // pred_check
          %p230 = pneg %p106
        $region38: #{tpu_custom_call.1} parent=35 // pred_check_branch
          %232 = sbr.rel (%p230) target = $region40
        $region39: #{tpu_custom_call.1} parent=35 // pred_region
          %234 = dma.done %s226, 32
        $region40: #{tpu_custom_call.1} parent=35 // pred_fallthru
          _
        %p235 = scmp.lt.s32.totalorder %s25, 1
        %s236 = scalar_select %p235, %s25, 1
        %s237 = scalar_lea.vmem %s0, %s236
        %p238 = pneg %p54
        %p239 = pneg %p51
        %p240 = scmp.lt.s32.totalorder %s26, 3
        %s241 = scalar_select %p240, %s26, 3
        %s242 = smul.addr %s241, 8
        %s243 = smul.addr %s242, 4
        %s244 = scalar_lea.vmem %s1, %s243
        %p245 = pneg %p80
        %p246 = pneg %p77
        %s247 = sand.u32 %s93, 1
        %s248 = scalar_lea.sflag [#allocation3], %s247
        %s249 = sand.u32 %s93, 1
        %s250 = smul.addr %s249, 2
        %s251 = scalar_lea.vmem [#allocation2], %s250
        %p252 = pneg %p106
        %p253 = pneg %p103
        %p254 = scmp.lt.s32.totalorder %s26, 3
        %s255 = scalar_select %p254, %s26, 3
        %s256 = smul.addr %s255, 4
        %s257 = smul.addr %s256, 8
        %s258 = scalar_lea.vmem %s3, %s257
        %p259 = pneg %p132
        %p260 = pneg %p129
        %p261 = pneg %p158
        %p262 = pneg %p155
        %s263 = sand.u32 %s145, 1
        %s264 = scalar_lea.sflag [#allocation4], %s263
        %s265 = sand.u32 %s145, 1
        %s266 = smul.addr %s265, 64
        %s267 = scalar_lea.vmem [#allocation5], %s266
        %p268 = scmp.lt.s32.totalorder %s25, 1
        %s269 = scalar_select %p268, %s25, 1
        %s270 = scalar_lea.vmem %s0, %s269
        %p271 = scmp.lt.s32.totalorder %s26, 3
        %s272 = scalar_select %p271, %s26, 3
        %s273 = smul.addr %s272, 8
        %s274 = smul.addr %s273, 4
        %s275 = scalar_lea.vmem %s1, %s274
        %p276 = scmp.lt.s32.totalorder %s26, 3
        %s277 = scalar_select %p276, %s26, 3
        %s278 = smul.addr %s277, 4
        %s279 = smul.addr %s278, 8
        %s280 = scalar_lea.vmem %s3, %s279
        %p282 = scmp.eq.s32.totalorder %s26, 0
        // Predicated region
        $region41: #{tpu_custom_call.1} parent=35 // pred_check
          %p283 = pneg %p282
        $region42: #{tpu_custom_call.1} parent=35 // pred_check_branch
          %285 = sbr.rel (%p283) target = $region44
        $region43: #{tpu_custom_call.1} parent=35 // pred_region
          %286 = vst [vmem:[%s267] sm:$0xff] 0.0
          %287 = vst [vmem:[%s267 + $0x8] sm:$0xff] 0.0
          %288 = vst [vmem:[%s267 + $0x10] sm:$0xff] 0.0
          %289 = vst [vmem:[%s267 + $0x18] sm:$0xff] 0.0
          %290 = vst [vmem:[%s267 + $0x20] sm:$0xff] 0.0
          %291 = vst [vmem:[%s267 + $0x28] sm:$0xff] 0.0
          %292 = vst [vmem:[%s267 + $0x30] sm:$0xff] 0.0
          %293 = vst [vmem:[%s267 + $0x38] sm:$0xff] 0.0
        $region44: #{tpu_custom_call.1} parent=35 // pred_fallthru
          _
        %v294 = vld [vmem:[%s270] sm:$0x1]
        %v295 = vpack.c.bf16 %v294, %v294
        %v296 = vld [vmem:[%s275] sm:$0xff]
        %v297 = vld [vmem:[%s275 + $0x8] sm:$0xff]
        %v298 = vld [vmem:[%s275 + $0x10] sm:$0xff]
        %v299 = vld [vmem:[%s275 + $0x18] sm:$0xff]
        %v300 = vld [vmem:[%s229] sm:$0x3]
        %v305 = vunpack.c.l.b16 %v296
        %v306 = vunpack.c.h.b16 %v296
        %v307 = vunpack.c.l.b16 %v297
        %v308 = vunpack.c.h.b16 %v297
        %v309 = vunpack.c.l.b16 %v298
        %v310 = vunpack.c.h.b16 %v298
        %v311 = vunpack.c.l.b16 %v299
        %v312 = vunpack.c.h.b16 %v299
        %v313 = vpack.c.b16 %v307, %v305
        %v314 = vpack.c.b16 %v308, %v306
        %v315 = vpack.c.b16 %v311, %v309
        %v316 = vpack.c.b16 %v312, %v310
        %v322 = vperm.slane %v300, 0
        %v323 = vperm.slane %v300, 1
        %vm326 = vcmask 261120
        %v328 = vsel %vm326, %v295, 0
        %330 = vmatpush.bf16.msra.mxu0 0
        %331 = vmatpush.bf16.msra.mxu0 0
        %332 = vmatpush.bf16.msra.mxu0 0
        %333 = vmatpush.bf16.msra.mxu0 0
        %334 = vmatpush.bf16.msra.mxu0 0
        %335 = vmatpush.bf16.msra.mxu0 0
        %336 = vmatpush.bf16.msra.mxu0 %v315
        %337 = vmatpush.bf16.msra.mxu0 %v313
        %338 = vmatmul.bf16.gmra.mxu0 %v328
        %v339 = vpop.f32.mrf.mxu0
        %v340 = vadd.f32 %v322, %v339
        %v341 = vpop.f32.mrf.mxu0
        %342 = vdwg.mxu0
        %343 = vmatpush.bf16.msra.mxu0 0
        %344 = vmatpush.bf16.msra.mxu0 0
        %345 = vmatpush.bf16.msra.mxu0 0
        %346 = vmatpush.bf16.msra.mxu0 0
        %347 = vmatpush.bf16.msra.mxu0 0
        %348 = vmatpush.bf16.msra.mxu0 0
        %349 = vmatpush.bf16.msra.mxu0 %v316
        %350 = vmatpush.bf16.msra.mxu0 %v314
        %351 = vmatmul.bf16.gmra.mxu0 %v328
        %v352 = vpop.f32.mrf.mxu0
        %v353 = vadd.f32 %v323, %v352
        %v354 = vpop.f32.mrf.mxu0
        %355 = vdwg.mxu0
        %v356 = vtanh.pop %v340
        %v357 = vtanh.pop %v353
        %v358 = vld [vmem:[%s267] sm:$0xff]
        %v359 = vld [vmem:[%s267 + $0x8] sm:$0xff]
        %v360 = vld [vmem:[%s267 + $0x10] sm:$0xff]
        %v361 = vld [vmem:[%s267 + $0x18] sm:$0xff]
        %v362 = vld [vmem:[%s267 + $0x20] sm:$0xff]
        %v363 = vld [vmem:[%s267 + $0x28] sm:$0xff]
        %v364 = vld [vmem:[%s267 + $0x30] sm:$0xff]
        %v365 = vld [vmem:[%s267 + $0x38] sm:$0xff]
        %v366 = vld [vmem:[%s280] sm:$0xff]
        %v367 = vld [vmem:[%s280 + $0x8] sm:$0xff]
        %v368 = vld [vmem:[%s280 + $0x10] sm:$0xff]
        %v369 = vld [vmem:[%s280 + $0x18] sm:$0xff]
        %371 = vset.pattern.permute.xlu0 0
        %372 = vperm.xlu0 %371, %v366
        %v373 = vpop.permute.xlu0 %372
        %376 = vset.pattern.permute.xlu0 0
        %377 = vperm.xlu0 %376, %v367
        %v378 = vpop.permute.xlu0 %377
        %381 = vset.pattern.permute.xlu0 0
        %382 = vperm.xlu0 %381, %v368
        %v383 = vpop.permute.xlu0 %382
        %386 = vset.pattern.permute.xlu0 0
        %387 = vperm.xlu0 %386, %v369
        %v388 = vpop.permute.xlu0 %387
        %v390 = vperm.slane %v356, 0
        %v391 = vperm.slane %v357, 0
        %v392 = vmul.f32 %v373, %v390
        %v393 = vmul.f32 %v373, %v391
        %v394 = vmul.f32 %v378, %v390
        %v395 = vmul.f32 %v378, %v391
        %v396 = vmul.f32 %v383, %v390
        %v397 = vmul.f32 %v383, %v391
        %v398 = vmul.f32 %v388, %v390
        %v399 = vmul.f32 %v388, %v391
        %v400 = vadd.f32 %v358, %v392
        %v401 = vadd.f32 %v359, %v393
        %v402 = vadd.f32 %v360, %v394
        %v403 = vadd.f32 %v361, %v395
        %v404 = vadd.f32 %v362, %v396
        %v405 = vadd.f32 %v363, %v397
        %v406 = vadd.f32 %v364, %v398
        %v407 = vadd.f32 %v365, %v399
        %408 = vst [vmem:[%s267] sm:$0xff] %v400
        %409 = vst [vmem:[%s267 + $0x8] sm:$0xff] %v401
        %410 = vst [vmem:[%s267 + $0x10] sm:$0xff] %v402
        %411 = vst [vmem:[%s267 + $0x18] sm:$0xff] %v403
        %412 = vst [vmem:[%s267 + $0x20] sm:$0xff] %v404
        %413 = vst [vmem:[%s267 + $0x28] sm:$0xff] %v405
        %414 = vst [vmem:[%s267 + $0x30] sm:$0xff] %v406
        %415 = vst [vmem:[%s267 + $0x38] sm:$0xff] %v407
        %s416 = sand.u32 %s145, 1
        %s417 = scalar_lea.sflag [#allocation4], %s416
        %s418 = sand.u32 %s145, 1
        %s419 = smul.addr %s418, 64
        %s420 = scalar_lea.vmem [#allocation5], %s419
        // Predicated region
        $region45: #{tpu_custom_call.1} parent=35 // pred_check
          %p421 = pneg %p155
        $region46: #{tpu_custom_call.1} parent=35 // pred_check_branch
          %423 = sbr.rel (%p421) target = $region48
        $region47: #{tpu_custom_call.1} parent=35 // pred_region
          %425 = vsyncadd %s417, 0
          %s426 = smul.addr %s25, 8
          %s427 = smul.addr %s426, 8
          %s428 = scalar_lea.hbm %s4, %s427
          %s429 = sshll.u32 %s420, 4
          %s430 = int_to_ptr.vmem [resolvable:$true] %s429
          %s431 = sshll.u32 %s428, 4
          %s432 = int_to_ptr.hbm [resolvable:$true] %s431
          %437 = dma.vmem_to_hbm [thread:$0]  %s430, 1024, %s432, %s417, 256, 256, 16
        $region48: #{tpu_custom_call.1} parent=35 // pred_fallthru
          _
      $region36: #{tpu_custom_call.1} parent=5 // pred_fallthru
        _
      %p438 = scmp.le.s32.totalorder 2, %s16
      // Predicated region
      $region49: #{tpu_custom_call.1} parent=5 // pred_check
        %p439 = pneg %p438
      $region50: #{tpu_custom_call.1} parent=5 // pred_check_branch
        %441 = sbr.rel (%p439) target = $region52
      $region51: #{tpu_custom_call.1} parent=5 // pred_region
        %s442 = ssub.s32 %s16, 2
        // Predicated region
        $region53: #{tpu_custom_call.1} parent=51 // pred_check
          %p443 = pneg %p161
        $region54: #{tpu_custom_call.1} parent=51 // pred_check_branch
          %445 = sbr.rel (%p443) target = $region56
        $region55: #{tpu_custom_call.1} parent=51 // pred_region
          %s446 = sand.u32 %s146, 1
          %s447 = scalar_lea.sflag [#allocation4], %s446
          %s448 = sand.u32 %s146, 1
          %s449 = smul.addr %s448, 64
          %s450 = scalar_lea.vmem [#allocation5], %s449
          %452 = dma.done %s447, 1024
        $region56: #{tpu_custom_call.1} parent=51 // pred_fallthru
          _
      $region52: #{tpu_custom_call.1} parent=5 // pred_fallthru
        _
    $region6: #{tpu_custom_call.1} parent=1 // loop_footer
      %s20 = sadd.s32 1, %s16
    $region7: #{tpu_custom_call.1} parent=1 // loop_footer_branch
      %15 = sbr.rel target = $region3
    $region8: #{tpu_custom_call.1} parent=1 // loop_exit
      _
    %453 = vsyncpa [#allocation3], 1
    %s454 = scalar_lea.sflag [#allocation3], 1
    %455 = vsyncpa %s454, 1
    %456 = vsyncpa [#allocation4], 1
    %s457 = scalar_lea.sflag [#allocation4], 1
    %458 = vsyncpa %s457, 1

</llo_original>
